<compile_context>
chip_gen: v7x
topology: tpu7x:2x2x1
jax: 0.10.0
libtpu: 0.0.40
codegen_flags: <defaults>
</compile_context>

<pallas_src>
import numpy as np
import jax
import jax.numpy as jnp
from jax.experimental import pallas as pl
from jax.experimental.pallas import tpu as pltpu


def _serial_selection_kernel(f_ref, sel_ref, si_ref, sj_ref, pair_ref):
    """One batch block, batch-on-lanes layout.

    f_ref:    (N, M, Bb)  features block, bf16/f32, batch on the lane axis
    sel_ref:  (M, 1)      shared selection vector, f32
    si_ref:   (R, N)      one-hot selector for triu row index iu (R = #pairs, /8)
    sj_ref:   (R, N)      one-hot selector for triu col index ju
    pair_ref: (R, Bb)     pair_logits[iu, ju] for this batch block, f32
    """
    f = f_ref[...].astype(jnp.float32)          # f32 compute (safe on v5e/v6e/v7x)
    sel = sel_ref[...]                          # (M, 1)

    # first_logits = softmax over N of (features @ selection_vector)
    s = jnp.sum(f * sel[None, :, :], axis=1)                    # (N, Bb) sublane reduce over M
    s = s - jnp.max(s, axis=0, keepdims=True)
    e = jnp.exp(s)
    first = e * pl.reciprocal(jnp.sum(e, axis=0, keepdims=True),
                              approx=True)                      # (N, Bb)

    # output = first_logits^T @ features
    out = jnp.sum(first[:, None, :] * f, axis=0)                # (M, Bb)

    # second_logits = softmax over N of (output @ features^T)
    t = jnp.sum(f * out[None, :, :], axis=1)                    # (N, Bb)
    t = t - jnp.max(t, axis=0, keepdims=True)
    et = jnp.exp(t)
    second = et * pl.reciprocal(jnp.sum(et, axis=0, keepdims=True),
                                approx=True)                    # (N, Bb)

    # Upper-triangular pairs only: pair[r] = first[iu[r]] * second[ju[r]].
    # Static one-hot matmuls (tiny MXU work) instead of a sublane gather; the
    # full (N, N) outer product is never materialized.
    fi = jnp.dot(si_ref[...], first, preferred_element_type=jnp.float32)   # (R, Bb)
    sj = jnp.dot(sj_ref[...], second, preferred_element_type=jnp.float32)  # (R, Bb)
    pair_ref[...] = fi * sj


def _pick_batch_block(batch, block_b):
    """Pick (Bb, padded_batch). Bb is the lane axis -> must be a multiple of 128.

    Cost model (in element-equivalents): padded elements moved over HBM plus a
    ~0.35us per-grid-step pipeline overhead (~a few hundred elements' worth),
    so an unlucky batch size doesn't waste nearly a full block of DMA+compute.
    """
    bb_max = max(128, (int(block_b) // 128) * 128)
    best = None
    for c in (128, 256, 512, 1024, 2048, 4096):
        if c > bb_max:
            break
        padded = ((batch + c - 1) // c) * c
        cost = padded + (padded // c) * 256
        if best is None or cost < best[0]:
            best = (cost, c, padded)
    return best[1], best[2]


def serial_selection_forward(features, selection_vector, asset_num, hidden_dim,
                             block_b=1024, cast_to_bf16=True):
    """features: any shape reshapeable to (-1, asset_num, hidden_dim).

    Returns (batch, asset_num*(asset_num-1)//2) float32, matching the module.
    block_b: max batch elements per grid step (multiple of 128). 1024 fits the
    v5e 16 MiB default scoped VMEM; 2048 is a good choice on v6e/v7x.
    """
    N, M = asset_num, hidden_dim
    f = features.reshape(-1, N, M)
    B = f.shape[0]

    # Batch-on-lanes layout; transpose + (optional) bf16 cast is one fused XLA pass.
    in_dtype = jnp.bfloat16 if cast_to_bf16 else jnp.float32
    f_t = jnp.transpose(f, (1, 2, 0)).astype(in_dtype)           # (N, M, B)

    Bb, B_pad = _pick_batch_block(B, block_b)
    if B_pad != B:
        # Zero-padded batch columns give a uniform softmax (no NaNs) and are
        # sliced off below.
        f_t = jnp.pad(f_t, ((0, 0), (0, 0), (0, B_pad - B)))

    sel = selection_vector.reshape(M, 1).astype(jnp.float32)

    # Static triu(N, N, 1) selection matrices (one-hot rows), rows padded to /8.
    iu, ju = np.triu_indices(N, k=1)
    n_pairs = int(iu.size)
    R = ((n_pairs + 7) // 8) * 8
    si_np = np.zeros((R, N), np.float32)
    sj_np = np.zeros((R, N), np.float32)
    si_np[np.arange(n_pairs), iu] = 1.0
    sj_np[np.arange(n_pairs), ju] = 1.0
    si = jnp.asarray(si_np)
    sj = jnp.asarray(sj_np)

    pair = pl.pallas_call(
        _serial_selection_kernel,
        out_shape=jax.ShapeDtypeStruct((R, B_pad), jnp.float32),
        grid_spec=pltpu.PrefetchScalarGridSpec(
            num_scalar_prefetch=0,
            grid=(B_pad // Bb,),
            in_specs=[
                pl.BlockSpec((N, M, Bb), lambda b: (0, 0, b)),   # batched features
                pl.BlockSpec((M, 1), lambda b: (0, 0)),          # shared selection vec
                pl.BlockSpec((R, N), lambda b: (0, 0)),          # triu row selector
                pl.BlockSpec((R, N), lambda b: (0, 0)),          # triu col selector
            ],
            out_specs=pl.BlockSpec((R, Bb), lambda b: (0, b)),   # lane-dense pairs
        ),
        compiler_params=pltpu.CompilerParams(
            dimension_semantics=("parallel",),                   # use CORE_PARALLEL on v7x
            vmem_limit_bytes=32 * 1024 * 1024,
        ),
    )(f_t, sel, si, sj)

    # (R, B_pad) -> (B, n_pairs): drop padded rows/cols, batch back to dim 0.
    return jnp.transpose(pair[:n_pairs, :B])


def serial_selection_reference(features, selection_vector, asset_num, hidden_dim):
    """Pure-JAX reference mirroring the PyTorch forward, for validation."""
    f = features.reshape(-1, asset_num, hidden_dim).astype(jnp.float32)
    sel = selection_vector.reshape(hidden_dim).astype(jnp.float32)
    s = jnp.einsum("bnm,m->bn", f, sel)[..., None]               # (B, N, 1)
    first = jax.nn.softmax(s, axis=1)                            # softmax over N
    out = jnp.einsum("bn,bnm->bm", first[..., 0], f)[:, None]    # (B, 1, M)
    t = jnp.einsum("bqm,bnm->bqn", out, f)                       # (B, 1, N)
    second = jax.nn.softmax(t, axis=-1)
    pair = jnp.einsum("bnq,bqk->bnk", first, second)             # (B, N, N)
    iu, ju = jnp.triu_indices(asset_num, k=1)
    return pair[:, iu, ju]


if __name__ == "__main__":
    # Small shapes consistent with the module: N=asset_num=16, M=hidden_dim=32.
    B, N, M = 2, 16, 32
    key = jax.random.PRNGKey(0)
    features = jax.random.normal(key, (B, N, M), dtype=jnp.float32)

    # Deterministic parameter init matching __init__: selection_vector = ones(M)[None].
    selection_vector = jnp.ones((1, M), dtype=jnp.float32)

    # TODO(synk): first_cross_attention / second_cross_attention are declared in
    # __init__ but never used in forward(), so they are intentionally not implemented.

    out = serial_selection_forward(features, selection_vector, N, M)
    out = jax.block_until_ready(out)
    assert out.shape == (B, N * (N - 1) // 2)

    # Primary check: reference on the same bf16-rounded features (the only
    # intended kernel-path deviations are the bf16 HBM boundary and the EUP
    # approximate reciprocal in the softmax normalizations).
    f_bf16 = features.astype(jnp.bfloat16).astype(jnp.float32)
    ref_matched = serial_selection_reference(f_bf16, selection_vector, N, M)
    assert jnp.allclose(out, ref_matched, atol=3e-4, rtol=3e-3), \
        float(jnp.max(jnp.abs(out - ref_matched)))

    # Looser sanity check against the full-f32 reference (bf16 input rounding).
    ref_f32 = serial_selection_reference(features, selection_vector, N, M)
    assert jnp.allclose(out, ref_f32, atol=5e-3, rtol=1e-1)

    print("KERNEL_OK")
</pallas_src>

<mosaic_0001>
module attributes {stable_mosaic.version = 11 : i64} {
  func.func @_serial_selection_kernel(%arg0: i32, %arg1: memref<16x32x128xbf16, #tpu.memory_space<vmem>>, %arg2: memref<32x1xf32, #tpu.memory_space<vmem>>, %arg3: memref<120x16xf32, #tpu.memory_space<vmem>>, %arg4: memref<120x16xf32, #tpu.memory_space<vmem>>, %arg5: memref<120x128xf32, #tpu.memory_space<vmem>>) attributes {dimension_semantics = [#tpu.dimension_semantics<parallel>], iteration_bounds = array<i64: 1>, scalar_prefetch = 0 : i64, scratch_operands = 0 : i64, tpu.core_type = #tpu.core_type<tc>, window_params = [{transform_indices = @transform_0, window_bounds = array<i64: 16, 32, 128>}, {pipeline_mode = #tpu.pipeline_mode<synchronous>, transform_indices = @transform_1, window_bounds = array<i64: 32, 1>}, {pipeline_mode = #tpu.pipeline_mode<synchronous>, transform_indices = @transform_2, window_bounds = array<i64: 120, 16>}, {pipeline_mode = #tpu.pipeline_mode<synchronous>, transform_indices = @transform_3, window_bounds = array<i64: 120, 16>}, {transform_indices = @transform_4, window_bounds = array<i64: 120, 128>}]} {
    %c0 = arith.constant 0 : index
    %c0_0 = arith.constant 0 : index
    %c0_1 = arith.constant 0 : index
    %0 = vector.load %arg1[%c0, %c0_0, %c0_1] : memref<16x32x128xbf16, #tpu.memory_space<vmem>>, vector<16x32x128xbf16>
    %1 = arith.extf %0 : vector<16x32x128xbf16> to vector<16x32x128xf32>
    %c0_2 = arith.constant 0 : index
    %c0_3 = arith.constant 0 : index
    %2 = vector.load %arg2[%c0_2, %c0_3] : memref<32x1xf32, #tpu.memory_space<vmem>>, vector<32x1xf32>
    %3 = vector.shape_cast %2 : vector<32x1xf32> to vector<1x32x1xf32>
    %4 = vector.broadcast %3 : vector<1x32x1xf32> to vector<16x32x128xf32>
    %5 = arith.mulf %1, %4 : vector<16x32x128xf32>
    %cst = arith.constant dense<0.000000e+00> : vector<16x128xf32>
    %6 = vector.multi_reduction <add>, %5, %cst [1] : vector<16x32x128xf32> to vector<16x128xf32>
    %cst_4 = arith.constant dense<0xFF800000> : vector<128xf32>
    %7 = vector.multi_reduction <maximumf>, %6, %cst_4 [0] : vector<16x128xf32> to vector<128xf32>
    %8 = vector.shape_cast %7 : vector<128xf32> to vector<1x128xf32>
    %9 = vector.broadcast %8 : vector<1x128xf32> to vector<16x128xf32>
    %10 = arith.subf %6, %9 : vector<16x128xf32>
    %11 = math.exp %10 : vector<16x128xf32>
    %cst_5 = arith.constant dense<0.000000e+00> : vector<128xf32>
    %12 = vector.multi_reduction <add>, %11, %cst_5 [0] : vector<16x128xf32> to vector<128xf32>
    %13 = vector.shape_cast %12 : vector<128xf32> to vector<1x128xf32>
    %14 = tpu.reciprocal %13 {approx = true} : vector<1x128xf32> -> vector<1x128xf32>
    %15 = vector.broadcast %14 : vector<1x128xf32> to vector<16x128xf32>
    %16 = arith.mulf %11, %15 : vector<16x128xf32>
    %17 = vector.shape_cast %16 : vector<16x128xf32> to vector<16x1x128xf32>
    %18 = vector.broadcast %17 : vector<16x1x128xf32> to vector<16x32x128xf32>
    %19 = arith.mulf %18, %1 : vector<16x32x128xf32>
    %cst_6 = arith.constant dense<0.000000e+00> : vector<32x128xf32>
    %20 = vector.multi_reduction <add>, %19, %cst_6 [0] : vector<16x32x128xf32> to vector<32x128xf32>
    %21 = vector.shape_cast %20 : vector<32x128xf32> to vector<1x32x128xf32>
    %22 = vector.broadcast %21 : vector<1x32x128xf32> to vector<16x32x128xf32>
    %23 = arith.mulf %1, %22 : vector<16x32x128xf32>
    %cst_7 = arith.constant dense<0.000000e+00> : vector<16x128xf32>
    %24 = vector.multi_reduction <add>, %23, %cst_7 [1] : vector<16x32x128xf32> to vector<16x128xf32>
    %cst_8 = arith.constant dense<0xFF800000> : vector<128xf32>
    %25 = vector.multi_reduction <maximumf>, %24, %cst_8 [0] : vector<16x128xf32> to vector<128xf32>
    %26 = vector.shape_cast %25 : vector<128xf32> to vector<1x128xf32>
    %27 = vector.broadcast %26 : vector<1x128xf32> to vector<16x128xf32>
    %28 = arith.subf %24, %27 : vector<16x128xf32>
    %29 = math.exp %28 : vector<16x128xf32>
    %cst_9 = arith.constant dense<0.000000e+00> : vector<128xf32>
    %30 = vector.multi_reduction <add>, %29, %cst_9 [0] : vector<16x128xf32> to vector<128xf32>
    %31 = vector.shape_cast %30 : vector<128xf32> to vector<1x128xf32>
    %32 = tpu.reciprocal %31 {approx = true} : vector<1x128xf32> -> vector<1x128xf32>
    %33 = vector.broadcast %32 : vector<1x128xf32> to vector<16x128xf32>
    %34 = arith.mulf %29, %33 : vector<16x128xf32>
    %c0_10 = arith.constant 0 : index
    %c0_11 = arith.constant 0 : index
    %35 = vector.load %arg3[%c0_10, %c0_11] : memref<120x16xf32, #tpu.memory_space<vmem>>, vector<120x16xf32>
    %cst_12 = arith.constant dense<0.000000e+00> : vector<120x128xf32>
    %36 = tpu.matmul %35, %16, %cst_12 {dimension_numbers = #tpu.dot_dimension_numbers<[1], [0], [0], [1], [0, 0, 1, 1], [], []>} : vector<120x16xf32>, vector<16x128xf32>, vector<120x128xf32> -> vector<120x128xf32>
    %c0_13 = arith.constant 0 : index
    %c0_14 = arith.constant 0 : index
    %37 = vector.load %arg4[%c0_13, %c0_14] : memref<120x16xf32, #tpu.memory_space<vmem>>, vector<120x16xf32>
    %cst_15 = arith.constant dense<0.000000e+00> : vector<120x128xf32>
    %38 = tpu.matmul %37, %34, %cst_15 {dimension_numbers = #tpu.dot_dimension_numbers<[1], [0], [0], [1], [0, 0, 1, 1], [], []>} : vector<120x16xf32>, vector<16x128xf32>, vector<120x128xf32> -> vector<120x128xf32>
    %39 = arith.mulf %36, %38 : vector<120x128xf32>
    %c0_16 = arith.constant 0 : index
    %c0_17 = arith.constant 0 : index
    %40 = vector.load %arg5[%c0_16, %c0_17] : memref<120x128xf32, #tpu.memory_space<vmem>>, vector<120x128xf32>
    tpu.vector_store %arg5[%c0_16, %c0_17], %39 {strides = array<i32>} : memref<120x128xf32, #tpu.memory_space<vmem>>, vector<120x128xf32>,
    return
  }
  func.func @transform_0(%arg0: i32) -> (i32, i32, i32) {
    %c0_i32 = arith.constant 0 : i32
    %c0_i32_0 = arith.constant 0 : i32
    %c0_i32_1 = arith.constant 0 : i32
    return %c0_i32, %c0_i32_0, %arg0 : i32, i32, i32
  }
  func.func @transform_1(%arg0: i32) -> (i32, i32) {
    %c0_i32 = arith.constant 0 : i32
    %c0_i32_0 = arith.constant 0 : i32
    %c0_i32_1 = arith.constant 0 : i32
    return %c0_i32, %c0_i32_0 : i32, i32
  }
  func.func @transform_2(%arg0: i32) -> (i32, i32) {
    %c0_i32 = arith.constant 0 : i32
    %c0_i32_0 = arith.constant 0 : i32
    %c0_i32_1 = arith.constant 0 : i32
    return %c0_i32, %c0_i32_0 : i32, i32
  }
  func.func @transform_3(%arg0: i32) -> (i32, i32) {
    %c0_i32 = arith.constant 0 : i32
    %c0_i32_0 = arith.constant 0 : i32
    %c0_i32_1 = arith.constant 0 : i32
    return %c0_i32, %c0_i32_0 : i32, i32
  }
  func.func @transform_4(%arg0: i32) -> (i32, i32) {
    %c0_i32 = arith.constant 0 : i32
    %c0_i32_0 = arith.constant 0 : i32
    return %c0_i32, %arg0 : i32, i32
  }
}

</mosaic_0001>

<llo_original>
// kernel: tpu_custom_call.1
$region0: #{tpu_custom_call.1}
  #allocation0 [shape = 'u32[]', space=smem, size = 0x4, offset = 0x4, fixed_abs, tag = 'smem constant byte address 0x4 - core index']
  #allocation1 [shape = 'u32[144,128]{1,0:T(1,128)}', space=vmem, size = 0x12000, scoped, tag = 'internal scratch']
  %s0 = inlined_call_operand.vmem [shape: bf16[16,32,128], index: 0, kind: input, shape index: {}]
  %s1 = inlined_call_operand.vmem [shape: f32[32,1], index: 1, kind: input, shape index: {}]
  %s2 = inlined_call_operand.vmem [shape: f32[120,16], index: 2, kind: input, shape index: {}]
  %s3 = inlined_call_operand.vmem [shape: f32[120,16], index: 3, kind: input, shape index: {}]
  %s4 = inlined_call_operand.hbm [shape: f32[120,128], index: 4, kind: output, shape index: {}]
  %s5 = sld [smem:[#allocation0]]
  $region26: #{tpu_custom_call.1} parent=0
    _
  %s7 = ssub.s32 1, %s5
  %s8 = scalar_select 0, %s7, %s5
  $region1: #{tpu_custom_call.1} parent=0
    #allocation2 [shape = 'u8[61440]{0}', space=vmem, size = 0xf000, scoped, tag = 'output window, operand 0, single buffered']
    #allocation3 [shape = 's32[1]{0}', space=sflag, size = 0x4, scoped, tag = 'scoped memory for tpu_custom_call.1']
    %9 = vsyncpa [#allocation3], 0
    // Predicated region
    $region2: #{tpu_custom_call.1} parent=1 // pred_check
      _
    $region3: #{tpu_custom_call.1} parent=1 // pred_check_branch
      %11 = sbr.rel (0) target = $region5
    $region4: #{tpu_custom_call.1} parent=1 // pred_region
      _
    $region5: #{tpu_custom_call.1} parent=1 // pred_fallthru
      _
    // Predicated region
    $region6: #{tpu_custom_call.1} parent=1 // pred_check
      _
    $region7: #{tpu_custom_call.1} parent=1 // pred_check_branch
      %13 = sbr.rel (0) target = $region9
    $region8: #{tpu_custom_call.1} parent=1 // pred_region
      _
    $region9: #{tpu_custom_call.1} parent=1 // pred_fallthru
      _
    // Predicated region
    $region10: #{tpu_custom_call.1} parent=1 // pred_check
      _
    $region11: #{tpu_custom_call.1} parent=1 // pred_check_branch
      %15 = sbr.rel (0) target = $region13
    $region12: #{tpu_custom_call.1} parent=1 // pred_region
      _
    $region13: #{tpu_custom_call.1} parent=1 // pred_fallthru
      _
    // Predicated region
    $region14: #{tpu_custom_call.1} parent=1 // pred_check
      _
    $region15: #{tpu_custom_call.1} parent=1 // pred_check_branch
      %17 = sbr.rel (0) target = $region17
    $region16: #{tpu_custom_call.1} parent=1 // pred_region
      _
    $region17: #{tpu_custom_call.1} parent=1 // pred_fallthru
      _
    %v18 = vld [vmem:[%s0] sm:$0xf]
    %v19 = vld [vmem:[%s0 + $0x4] sm:$0xf]
    %v20 = vld [vmem:[%s0 + $0x8] sm:$0xf]
    %v21 = vld [vmem:[%s0 + $0xc] sm:$0xf]
    %v22 = vld [vmem:[%s0 + $0x10] sm:$0xf]
    %v23 = vld [vmem:[%s0 + $0x14] sm:$0xf]
    %v24 = vld [vmem:[%s0 + $0x18] sm:$0xf]
    %v25 = vld [vmem:[%s0 + $0x1c] sm:$0xf]
    %v26 = vld [vmem:[%s0 + $0x20] sm:$0xf]
    %v27 = vld [vmem:[%s0 + $0x24] sm:$0xf]
    %v28 = vld [vmem:[%s0 + $0x28] sm:$0xf]
    %v29 = vld [vmem:[%s0 + $0x2c] sm:$0xf]
    %v30 = vld [vmem:[%s0 + $0x30] sm:$0xf]
    %v31 = vld [vmem:[%s0 + $0x34] sm:$0xf]
    %v32 = vld [vmem:[%s0 + $0x38] sm:$0xf]
    %v33 = vld [vmem:[%s0 + $0x3c] sm:$0xf]
    %v34 = vld [vmem:[%s0 + $0x40] sm:$0xf]
    %v35 = vld [vmem:[%s0 + $0x44] sm:$0xf]
    %v36 = vld [vmem:[%s0 + $0x48] sm:$0xf]
    %v37 = vld [vmem:[%s0 + $0x4c] sm:$0xf]
    %v38 = vld [vmem:[%s0 + $0x50] sm:$0xf]
    %v39 = vld [vmem:[%s0 + $0x54] sm:$0xf]
    %v40 = vld [vmem:[%s0 + $0x58] sm:$0xf]
    %v41 = vld [vmem:[%s0 + $0x5c] sm:$0xf]
    %v42 = vld [vmem:[%s0 + $0x60] sm:$0xf]
    %v43 = vld [vmem:[%s0 + $0x64] sm:$0xf]
    %v44 = vld [vmem:[%s0 + $0x68] sm:$0xf]
    %v45 = vld [vmem:[%s0 + $0x6c] sm:$0xf]
    %v46 = vld [vmem:[%s0 + $0x70] sm:$0xf]
    %v47 = vld [vmem:[%s0 + $0x74] sm:$0xf]
    %v48 = vld [vmem:[%s0 + $0x78] sm:$0xf]
    %v49 = vld [vmem:[%s0 + $0x7c] sm:$0xf]
    %v50 = vld [vmem:[%s0 + $0x80] sm:$0xf]
    %v51 = vld [vmem:[%s0 + $0x84] sm:$0xf]
    %v52 = vld [vmem:[%s0 + $0x88] sm:$0xf]
    %v53 = vld [vmem:[%s0 + $0x8c] sm:$0xf]
    %v54 = vld [vmem:[%s0 + $0x90] sm:$0xf]
    %v55 = vld [vmem:[%s0 + $0x94] sm:$0xf]
    %v56 = vld [vmem:[%s0 + $0x98] sm:$0xf]
    %v57 = vld [vmem:[%s0 + $0x9c] sm:$0xf]
    %v58 = vld [vmem:[%s0 + $0xa0] sm:$0xf]
    %v59 = vld [vmem:[%s0 + $0xa4] sm:$0xf]
    %v60 = vld [vmem:[%s0 + $0xa8] sm:$0xf]
    %v61 = vld [vmem:[%s0 + $0xac] sm:$0xf]
    %v62 = vld [vmem:[%s0 + $0xb0] sm:$0xf]
    %v63 = vld [vmem:[%s0 + $0xb4] sm:$0xf]
    %v64 = vld [vmem:[%s0 + $0xb8] sm:$0xf]
    %v65 = vld [vmem:[%s0 + $0xbc] sm:$0xf]
    %v66 = vld [vmem:[%s0 + $0xc0] sm:$0xf]
    %v67 = vld [vmem:[%s0 + $0xc4] sm:$0xf]
    %v68 = vld [vmem:[%s0 + $0xc8] sm:$0xf]
    %v69 = vld [vmem:[%s0 + $0xcc] sm:$0xf]
    %v70 = vld [vmem:[%s0 + $0xd0] sm:$0xf]
    %v71 = vld [vmem:[%s0 + $0xd4] sm:$0xf]
    %v72 = vld [vmem:[%s0 + $0xd8] sm:$0xf]
    %v73 = vld [vmem:[%s0 + $0xdc] sm:$0xf]
    %v74 = vld [vmem:[%s0 + $0xe0] sm:$0xf]
    %v75 = vld [vmem:[%s0 + $0xe4] sm:$0xf]
    %v76 = vld [vmem:[%s0 + $0xe8] sm:$0xf]
    %v77 = vld [vmem:[%s0 + $0xec] sm:$0xf]
    %v78 = vld [vmem:[%s0 + $0xf0] sm:$0xf]
    %v79 = vld [vmem:[%s0 + $0xf4] sm:$0xf]
    %v80 = vld [vmem:[%s0 + $0xf8] sm:$0xf]
    %v81 = vld [vmem:[%s0 + $0xfc] sm:$0xf]
    %v82 = vunpack.c.l.bf16 %v18
    %v83 = vunpack.c.l.bf16 %v19
    %v84 = vunpack.c.l.bf16 %v20
    %v85 = vunpack.c.l.bf16 %v21
    %v86 = vunpack.c.l.bf16 %v22
    %v87 = vunpack.c.l.bf16 %v23
    %v88 = vunpack.c.l.bf16 %v24
    %v89 = vunpack.c.l.bf16 %v25
    %v90 = vunpack.c.l.bf16 %v26
    %v91 = vunpack.c.l.bf16 %v27
    %v92 = vunpack.c.l.bf16 %v28
    %v93 = vunpack.c.l.bf16 %v29
    %v94 = vunpack.c.l.bf16 %v30
    %v95 = vunpack.c.l.bf16 %v31
    %v96 = vunpack.c.l.bf16 %v32
    %v97 = vunpack.c.l.bf16 %v33
    %v98 = vunpack.c.l.bf16 %v34
    %v99 = vunpack.c.l.bf16 %v35
    %v100 = vunpack.c.l.bf16 %v36
    %v101 = vunpack.c.l.bf16 %v37
    %v102 = vunpack.c.l.bf16 %v38
    %v103 = vunpack.c.l.bf16 %v39
    %v104 = vunpack.c.l.bf16 %v40
    %v105 = vunpack.c.l.bf16 %v41
    %v106 = vunpack.c.l.bf16 %v42
    %v107 = vunpack.c.l.bf16 %v43
    %v108 = vunpack.c.l.bf16 %v44
    %v109 = vunpack.c.l.bf16 %v45
    %v110 = vunpack.c.l.bf16 %v46
    %v111 = vunpack.c.l.bf16 %v47
    %v112 = vunpack.c.l.bf16 %v48
    %v113 = vunpack.c.l.bf16 %v49
    %v114 = vunpack.c.l.bf16 %v50
    %v115 = vunpack.c.l.bf16 %v51
    %v116 = vunpack.c.l.bf16 %v52
    %v117 = vunpack.c.l.bf16 %v53
    %v118 = vunpack.c.l.bf16 %v54
    %v119 = vunpack.c.l.bf16 %v55
    %v120 = vunpack.c.l.bf16 %v56
    %v121 = vunpack.c.l.bf16 %v57
    %v122 = vunpack.c.l.bf16 %v58
    %v123 = vunpack.c.l.bf16 %v59
    %v124 = vunpack.c.l.bf16 %v60
    %v125 = vunpack.c.l.bf16 %v61
    %v126 = vunpack.c.l.bf16 %v62
    %v127 = vunpack.c.l.bf16 %v63
    %v128 = vunpack.c.l.bf16 %v64
    %v129 = vunpack.c.l.bf16 %v65
    %v130 = vunpack.c.l.bf16 %v66
    %v131 = vunpack.c.l.bf16 %v67
    %v132 = vunpack.c.l.bf16 %v68
    %v133 = vunpack.c.l.bf16 %v69
    %v134 = vunpack.c.l.bf16 %v70
    %v135 = vunpack.c.l.bf16 %v71
    %v136 = vunpack.c.l.bf16 %v72
    %v137 = vunpack.c.l.bf16 %v73
    %v138 = vunpack.c.l.bf16 %v74
    %v139 = vunpack.c.l.bf16 %v75
    %v140 = vunpack.c.l.bf16 %v76
    %v141 = vunpack.c.l.bf16 %v77
    %v142 = vunpack.c.l.bf16 %v78
    %v143 = vunpack.c.l.bf16 %v79
    %v144 = vunpack.c.l.bf16 %v80
    %v145 = vunpack.c.l.bf16 %v81
    %v146 = vld [vmem:[%s1] sm:$0xff]
    %v147 = vld [vmem:[%s1 + $0x8] sm:$0xff]
    %v148 = vld [vmem:[%s1 + $0x10] sm:$0xff]
    %v149 = vld [vmem:[%s1 + $0x18] sm:$0xff]
    %151 = vset.pattern.permute.xlu0 0
    %152 = vperm.xlu0 %151, %v146
    %v153 = vpop.permute.xlu0 %152
    %156 = vset.pattern.permute.xlu0 0
    %157 = vperm.xlu0 %156, %v147
    %v158 = vpop.permute.xlu0 %157
    %161 = vset.pattern.permute.xlu0 0
    %162 = vperm.xlu0 %161, %v148
    %v163 = vpop.permute.xlu0 %162
    %166 = vset.pattern.permute.xlu0 0
    %167 = vperm.xlu0 %166, %v149
    %v168 = vpop.permute.xlu0 %167
    %v170 = vmul.f32 %v82, %v153
    %v171 = vmul.f32 %v83, %v158
    %v172 = vmul.f32 %v84, %v163
    %v173 = vmul.f32 %v85, %v168
    %v174 = vmul.f32 %v86, %v153
    %v175 = vmul.f32 %v87, %v158
    %v176 = vmul.f32 %v88, %v163
    %v177 = vmul.f32 %v89, %v168
    %v178 = vmul.f32 %v90, %v153
    %v179 = vmul.f32 %v91, %v158
    %v180 = vmul.f32 %v92, %v163
    %v181 = vmul.f32 %v93, %v168
    %v182 = vmul.f32 %v94, %v153
    %v183 = vmul.f32 %v95, %v158
    %v184 = vmul.f32 %v96, %v163
    %v185 = vmul.f32 %v97, %v168
    %v186 = vmul.f32 %v98, %v153
    %v187 = vmul.f32 %v99, %v158
    %v188 = vmul.f32 %v100, %v163
    %v189 = vmul.f32 %v101, %v168
    %v190 = vmul.f32 %v102, %v153
    %v191 = vmul.f32 %v103, %v158
    %v192 = vmul.f32 %v104, %v163
    %v193 = vmul.f32 %v105, %v168
    %v194 = vmul.f32 %v106, %v153
    %v195 = vmul.f32 %v107, %v158
    %v196 = vmul.f32 %v108, %v163
    %v197 = vmul.f32 %v109, %v168
    %v198 = vmul.f32 %v110, %v153
    %v199 = vmul.f32 %v111, %v158
    %v200 = vmul.f32 %v112, %v163
    %v201 = vmul.f32 %v113, %v168
    %v202 = vmul.f32 %v114, %v153
    %v203 = vmul.f32 %v115, %v158
    %v204 = vmul.f32 %v116, %v163
    %v205 = vmul.f32 %v117, %v168
    %v206 = vmul.f32 %v118, %v153
    %v207 = vmul.f32 %v119, %v158
    %v208 = vmul.f32 %v120, %v163
    %v209 = vmul.f32 %v121, %v168
    %v210 = vmul.f32 %v122, %v153
    %v211 = vmul.f32 %v123, %v158
    %v212 = vmul.f32 %v124, %v163
    %v213 = vmul.f32 %v125, %v168
    %v214 = vmul.f32 %v126, %v153
    %v215 = vmul.f32 %v127, %v158
    %v216 = vmul.f32 %v128, %v163
    %v217 = vmul.f32 %v129, %v168
    %v218 = vmul.f32 %v130, %v153
    %v219 = vmul.f32 %v131, %v158
    %v220 = vmul.f32 %v132, %v163
    %v221 = vmul.f32 %v133, %v168
    %v222 = vmul.f32 %v134, %v153
    %v223 = vmul.f32 %v135, %v158
    %v224 = vmul.f32 %v136, %v163
    %v225 = vmul.f32 %v137, %v168
    %v226 = vmul.f32 %v138, %v153
    %v227 = vmul.f32 %v139, %v158
    %v228 = vmul.f32 %v140, %v163
    %v229 = vmul.f32 %v141, %v168
    %v230 = vmul.f32 %v142, %v153
    %v231 = vmul.f32 %v143, %v158
    %v232 = vmul.f32 %v144, %v163
    %v233 = vmul.f32 %v145, %v168
    %v234 = vadd.f32 %v170, %v171
    %v235 = vadd.f32 %v234, %v172
    %v236 = vadd.f32 %v235, %v173
    %v237 = vrot.slane %v236, 4
    %v238 = vadd.f32 %v236, %v237
    %v239 = vrot.slane %v238, 2
    %v240 = vadd.f32 %v238, %v239
    %v241 = vrot.slane %v240, 1
    %v242 = vadd.f32 %v240, %v241
    %v243 = vadd.f32 %v174, %v175
    %v244 = vadd.f32 %v243, %v176
    %v245 = vadd.f32 %v244, %v177
    %v246 = vrot.slane %v245, 4
    %v247 = vadd.f32 %v245, %v246
    %v248 = vrot.slane %v247, 2
    %v249 = vadd.f32 %v247, %v248
    %v250 = vrot.slane %v249, 1
    %v251 = vadd.f32 %v249, %v250
    %v252 = vadd.f32 %v178, %v179
    %v253 = vadd.f32 %v252, %v180
    %v254 = vadd.f32 %v253, %v181
    %v255 = vrot.slane %v254, 4
    %v256 = vadd.f32 %v254, %v255
    %v257 = vrot.slane %v256, 2
    %v258 = vadd.f32 %v256, %v257
    %v259 = vrot.slane %v258, 1
    %v260 = vadd.f32 %v258, %v259
    %v261 = vadd.f32 %v182, %v183
    %v262 = vadd.f32 %v261, %v184
    %v263 = vadd.f32 %v262, %v185
    %v264 = vrot.slane %v263, 4
    %v265 = vadd.f32 %v263, %v264
    %v266 = vrot.slane %v265, 2
    %v267 = vadd.f32 %v265, %v266
    %v268 = vrot.slane %v267, 1
    %v269 = vadd.f32 %v267, %v268
    %v270 = vadd.f32 %v186, %v187
    %v271 = vadd.f32 %v270, %v188
    %v272 = vadd.f32 %v271, %v189
    %v273 = vrot.slane %v272, 4
    %v274 = vadd.f32 %v272, %v273
    %v275 = vrot.slane %v274, 2
    %v276 = vadd.f32 %v274, %v275
    %v277 = vrot.slane %v276, 1
    %v278 = vadd.f32 %v276, %v277
    %v279 = vadd.f32 %v190, %v191
    %v280 = vadd.f32 %v279, %v192
    %v281 = vadd.f32 %v280, %v193
    %v282 = vrot.slane %v281, 4
    %v283 = vadd.f32 %v281, %v282
    %v284 = vrot.slane %v283, 2
    %v285 = vadd.f32 %v283, %v284
    %v286 = vrot.slane %v285, 1
    %v287 = vadd.f32 %v285, %v286
    %v288 = vadd.f32 %v194, %v195
    %v289 = vadd.f32 %v288, %v196
    %v290 = vadd.f32 %v289, %v197
    %v291 = vrot.slane %v290, 4
    %v292 = vadd.f32 %v290, %v291
    %v293 = vrot.slane %v292, 2
    %v294 = vadd.f32 %v292, %v293
    %v295 = vrot.slane %v294, 1
    %v296 = vadd.f32 %v294, %v295
    %v297 = vadd.f32 %v198, %v199
    %v298 = vadd.f32 %v297, %v200
    %v299 = vadd.f32 %v298, %v201
    %v300 = vrot.slane %v299, 4
    %v301 = vadd.f32 %v299, %v300
    %v302 = vrot.slane %v301, 2
    %v303 = vadd.f32 %v301, %v302
    %v304 = vrot.slane %v303, 1
    %v305 = vadd.f32 %v303, %v304
    %v306 = vadd.f32 %v202, %v203
    %v307 = vadd.f32 %v306, %v204
    %v308 = vadd.f32 %v307, %v205
    %v309 = vrot.slane %v308, 4
    %v310 = vadd.f32 %v308, %v309
    %v311 = vrot.slane %v310, 2
    %v312 = vadd.f32 %v310, %v311
    %v313 = vrot.slane %v312, 1
    %v314 = vadd.f32 %v312, %v313
    %v315 = vadd.f32 %v206, %v207
    %v316 = vadd.f32 %v315, %v208
    %v317 = vadd.f32 %v316, %v209
    %v318 = vrot.slane %v317, 4
    %v319 = vadd.f32 %v317, %v318
    %v320 = vrot.slane %v319, 2
    %v321 = vadd.f32 %v319, %v320
    %v322 = vrot.slane %v321, 1
    %v323 = vadd.f32 %v321, %v322
    %v324 = vadd.f32 %v210, %v211
    %v325 = vadd.f32 %v324, %v212
    %v326 = vadd.f32 %v325, %v213
    %v327 = vrot.slane %v326, 4
    %v328 = vadd.f32 %v326, %v327
    %v329 = vrot.slane %v328, 2
    %v330 = vadd.f32 %v328, %v329
    %v331 = vrot.slane %v330, 1
    %v332 = vadd.f32 %v330, %v331
    %v333 = vadd.f32 %v214, %v215
    %v334 = vadd.f32 %v333, %v216
    %v335 = vadd.f32 %v334, %v217
    %v336 = vrot.slane %v335, 4
    %v337 = vadd.f32 %v335, %v336
    %v338 = vrot.slane %v337, 2
    %v339 = vadd.f32 %v337, %v338
    %v340 = vrot.slane %v339, 1
    %v341 = vadd.f32 %v339, %v340
    %v342 = vadd.f32 %v218, %v219
    %v343 = vadd.f32 %v342, %v220
    %v344 = vadd.f32 %v343, %v221
    %v345 = vrot.slane %v344, 4
    %v346 = vadd.f32 %v344, %v345
    %v347 = vrot.slane %v346, 2
    %v348 = vadd.f32 %v346, %v347
    %v349 = vrot.slane %v348, 1
    %v350 = vadd.f32 %v348, %v349
    %v351 = vadd.f32 %v222, %v223
    %v352 = vadd.f32 %v351, %v224
    %v353 = vadd.f32 %v352, %v225
    %v354 = vrot.slane %v353, 4
    %v355 = vadd.f32 %v353, %v354
    %v356 = vrot.slane %v355, 2
    %v357 = vadd.f32 %v355, %v356
    %v358 = vrot.slane %v357, 1
    %v359 = vadd.f32 %v357, %v358
    %v360 = vadd.f32 %v226, %v227
    %v361 = vadd.f32 %v360, %v228
    %v362 = vadd.f32 %v361, %v229
    %v363 = vrot.slane %v362, 4
    %v364 = vadd.f32 %v362, %v363
    %v365 = vrot.slane %v364, 2
    %v366 = vadd.f32 %v364, %v365
    %v367 = vrot.slane %v366, 1
    %v368 = vadd.f32 %v366, %v367
    %v369 = vadd.f32 %v230, %v231
    %v370 = vadd.f32 %v369, %v232
    %v371 = vadd.f32 %v370, %v233
    %v372 = vrot.slane %v371, 4
    %v373 = vadd.f32 %v371, %v372
    %v374 = vrot.slane %v373, 2
    %v375 = vadd.f32 %v373, %v374
    %v376 = vrot.slane %v375, 1
    %v377 = vadd.f32 %v375, %v376
    %v378 = vmax.f32 %v242, %v278
    %v379 = vmax.f32 %v251, %v287
    %v380 = vmax.f32 %v260, %v296
    %v381 = vmax.f32 %v269, %v305
    %v382 = vmax.f32 %v378, %v314
    %v383 = vmax.f32 %v379, %v323
    %v384 = vmax.f32 %v380, %v332
    %v385 = vmax.f32 %v381, %v341
    %v386 = vmax.f32 %v382, %v350
    %v387 = vmax.f32 %v383, %v359
    %v388 = vmax.f32 %v384, %v368
    %v389 = vmax.f32 %v385, %v377
    %v390 = vmax.f32 %v386, %v387
    %v391 = vmax.f32 %v388, %v389
    %v392 = vmax.f32 %v390, %v391
    %v393 = vsub.f32 %v242, %v392
    %v394 = vsub.f32 %v251, %v392
    %v395 = vsub.f32 %v260, %v392
    %v396 = vsub.f32 %v269, %v392
    %v397 = vsub.f32 %v278, %v392
    %v398 = vsub.f32 %v287, %v392
    %v399 = vsub.f32 %v296, %v392
    %v400 = vsub.f32 %v305, %v392
    %v401 = vsub.f32 %v314, %v392
    %v402 = vsub.f32 %v323, %v392
    %v403 = vsub.f32 %v332, %v392
    %v404 = vsub.f32 %v341, %v392
    %v405 = vsub.f32 %v350, %v392
    %v406 = vsub.f32 %v359, %v392
    %v407 = vsub.f32 %v368, %v392
    %v408 = vsub.f32 %v377, %v392
    %v409 = vmul.f32 %v393, 1.442695
    %v410 = vpow.pop %v409
    %v411 = vmul.f32 %v394, 1.442695
    %v412 = vpow.pop %v411
    %v413 = vmul.f32 %v395, 1.442695
    %v414 = vpow.pop %v413
    %v415 = vmul.f32 %v396, 1.442695
    %v416 = vpow.pop %v415
    %v417 = vmul.f32 %v397, 1.442695
    %v418 = vpow.pop %v417
    %v419 = vmul.f32 %v398, 1.442695
    %v420 = vpow.pop %v419
    %v421 = vmul.f32 %v399, 1.442695
    %v422 = vpow.pop %v421
    %v423 = vmul.f32 %v400, 1.442695
    %v424 = vpow.pop %v423
    %v425 = vmul.f32 %v401, 1.442695
    %v426 = vpow.pop %v425
    %v427 = vmul.f32 %v402, 1.442695
    %v428 = vpow.pop %v427
    %v429 = vmul.f32 %v403, 1.442695
    %v430 = vpow.pop %v429
    %v431 = vmul.f32 %v404, 1.442695
    %v432 = vpow.pop %v431
    %v433 = vmul.f32 %v405, 1.442695
    %v434 = vpow.pop %v433
    %v435 = vmul.f32 %v406, 1.442695
    %v436 = vpow.pop %v435
    %v437 = vmul.f32 %v407, 1.442695
    %v438 = vpow.pop %v437
    %v439 = vmul.f32 %v408, 1.442695
    %v440 = vpow.pop %v439
    %v457 = vrot.slane %v412, 7
    %vm458 = vcmask 1041409
    %v459 = vsel %vm458, %v457, %v410
    %v460 = vrot.slane %v414, 6
    %vm461 = vcmask 1042434
    %v462 = vsel %vm461, %v460, %v459
    %v463 = vrot.slane %v416, 5
    %vm464 = vcmask 1043459
    %v465 = vsel %vm464, %v463, %v462
    %v466 = vrot.slane %v418, 4
    %vm467 = vcmask 1044484
    %v468 = vsel %vm467, %v466, %v465
    %v469 = vrot.slane %v420, 3
    %vm470 = vcmask 1045509
    %v471 = vsel %vm470, %v469, %v468
    %v472 = vrot.slane %v422, 2
    %vm473 = vcmask 1046534
    %v474 = vsel %vm473, %v472, %v471
    %v475 = vrot.slane %v424, 1
    %vm476 = vcmask 1047559
    %v477 = vsel %vm476, %v475, %v474
    %v478 = vrot.slane %v428, 7
    %v479 = vsel %vm458, %v478, %v426
    %v480 = vrot.slane %v430, 6
    %v481 = vsel %vm461, %v480, %v479
    %v482 = vrot.slane %v432, 5
    %v483 = vsel %vm464, %v482, %v481
    %v484 = vrot.slane %v434, 4
    %v485 = vsel %vm467, %v484, %v483
    %v486 = vrot.slane %v436, 3
    %v487 = vsel %vm470, %v486, %v485
    %v488 = vrot.slane %v438, 2
    %v489 = vsel %vm473, %v488, %v487
    %v490 = vrot.slane %v440, 1
    %v491 = vsel %vm476, %v490, %v489
    %v494 = vadd.f32 %v477, %v491
    %v495 = vrot.slane %v494, 4
    %v496 = vadd.f32 %v494, %v495
    %v497 = vrot.slane %v496, 2
    %v498 = vadd.f32 %v496, %v497
    %v499 = vrot.slane %v498, 1
    %v500 = vadd.f32 %v498, %v499
    %v501 = vrcp.pop %v500
    %v502 = vlaneseq
    %v503 = vshrl.u32 %v502, 7
    %v504 = vsub.s32 0, %v503
    %v505 = vrot.slane %v501, %v504
    %v506 = vmul.f32 %v410, %v505
    %v507 = vmul.f32 %v412, %v505
    %v508 = vmul.f32 %v414, %v505
    %v509 = vmul.f32 %v416, %v505
    %v510 = vmul.f32 %v418, %v505
    %v511 = vmul.f32 %v420, %v505
    %v512 = vmul.f32 %v422, %v505
    %v513 = vmul.f32 %v424, %v505
    %v514 = vmul.f32 %v426, %v505
    %v515 = vmul.f32 %v428, %v505
    %v516 = vmul.f32 %v430, %v505
    %v517 = vmul.f32 %v432, %v505
    %v518 = vmul.f32 %v434, %v505
    %v519 = vmul.f32 %v436, %v505
    %v520 = vmul.f32 %v438, %v505
    %v521 = vmul.f32 %v440, %v505
    %v522 = vlaneseq
    %v523 = vshrl.u32 %v522, 7
    %v524 = vsub.s32 0, %v523
    %v525 = vrot.slane %v506, %v524
    %v526 = vlaneseq
    %v527 = vshrl.u32 %v526, 7
    %v528 = vsub.s32 0, %v527
    %v529 = vrot.slane %v507, %v528
    %v530 = vlaneseq
    %v531 = vshrl.u32 %v530, 7
    %v532 = vsub.s32 0, %v531
    %v533 = vrot.slane %v508, %v532
    %v534 = vlaneseq
    %v535 = vshrl.u32 %v534, 7
    %v536 = vsub.s32 0, %v535
    %v537 = vrot.slane %v509, %v536
    %v538 = vlaneseq
    %v539 = vshrl.u32 %v538, 7
    %v540 = vsub.s32 0, %v539
    %v541 = vrot.slane %v510, %v540
    %v542 = vlaneseq
    %v543 = vshrl.u32 %v542, 7
    %v544 = vsub.s32 0, %v543
    %v545 = vrot.slane %v511, %v544
    %v546 = vlaneseq
    %v547 = vshrl.u32 %v546, 7
    %v548 = vsub.s32 0, %v547
    %v549 = vrot.slane %v512, %v548
    %v550 = vlaneseq
    %v551 = vshrl.u32 %v550, 7
    %v552 = vsub.s32 0, %v551
    %v553 = vrot.slane %v513, %v552
    %v554 = vlaneseq
    %v555 = vshrl.u32 %v554, 7
    %v556 = vsub.s32 0, %v555
    %v557 = vrot.slane %v514, %v556
    %v558 = vlaneseq
    %v559 = vshrl.u32 %v558, 7
    %v560 = vsub.s32 0, %v559
    %v561 = vrot.slane %v515, %v560
    %v562 = vlaneseq
    %v563 = vshrl.u32 %v562, 7
    %v564 = vsub.s32 0, %v563
    %v565 = vrot.slane %v516, %v564
    %v566 = vlaneseq
    %v567 = vshrl.u32 %v566, 7
    %v568 = vsub.s32 0, %v567
    %v569 = vrot.slane %v517, %v568
    %v570 = vlaneseq
    %v571 = vshrl.u32 %v570, 7
    %v572 = vsub.s32 0, %v571
    %v573 = vrot.slane %v518, %v572
    %v574 = vlaneseq
    %v575 = vshrl.u32 %v574, 7
    %v576 = vsub.s32 0, %v575
    %v577 = vrot.slane %v519, %v576
    %v578 = vlaneseq
    %v579 = vshrl.u32 %v578, 7
    %v580 = vsub.s32 0, %v579
    %v581 = vrot.slane %v520, %v580
    %v582 = vlaneseq
    %v583 = vshrl.u32 %v582, 7
    %v584 = vsub.s32 0, %v583
    %v585 = vrot.slane %v521, %v584
    %v586 = vmul.f32 %v525, %v82
    %v587 = vmul.f32 %v525, %v83
    %v588 = vmul.f32 %v525, %v84
    %v589 = vmul.f32 %v525, %v85
    %v590 = vmul.f32 %v529, %v86
    %v591 = vmul.f32 %v529, %v87
    %v592 = vmul.f32 %v529, %v88
    %v593 = vmul.f32 %v529, %v89
    %v594 = vmul.f32 %v533, %v90
    %v595 = vmul.f32 %v533, %v91
    %v596 = vmul.f32 %v533, %v92
    %v597 = vmul.f32 %v533, %v93
    %v598 = vmul.f32 %v537, %v94
    %v599 = vmul.f32 %v537, %v95
    %v600 = vmul.f32 %v537, %v96
    %v601 = vmul.f32 %v537, %v97
    %v602 = vmul.f32 %v541, %v98
    %v603 = vmul.f32 %v541, %v99
    %v604 = vmul.f32 %v541, %v100
    %v605 = vmul.f32 %v541, %v101
    %v606 = vmul.f32 %v545, %v102
    %v607 = vmul.f32 %v545, %v103
    %v608 = vmul.f32 %v545, %v104
    %v609 = vmul.f32 %v545, %v105
    %v610 = vmul.f32 %v549, %v106
    %v611 = vmul.f32 %v549, %v107
    %v612 = vmul.f32 %v549, %v108
    %v613 = vmul.f32 %v549, %v109
    %v614 = vmul.f32 %v553, %v110
    %v615 = vmul.f32 %v553, %v111
    %v616 = vmul.f32 %v553, %v112
    %v617 = vmul.f32 %v553, %v113
    %v618 = vmul.f32 %v557, %v114
    %v619 = vmul.f32 %v557, %v115
    %v620 = vmul.f32 %v557, %v116
    %v621 = vmul.f32 %v557, %v117
    %v622 = vmul.f32 %v561, %v118
    %v623 = vmul.f32 %v561, %v119
    %v624 = vmul.f32 %v561, %v120
    %v625 = vmul.f32 %v561, %v121
    %v626 = vmul.f32 %v565, %v122
    %v627 = vmul.f32 %v565, %v123
    %v628 = vmul.f32 %v565, %v124
    %v629 = vmul.f32 %v565, %v125
    %v630 = vmul.f32 %v569, %v126
    %v631 = vmul.f32 %v569, %v127
    %v632 = vmul.f32 %v569, %v128
    %v633 = vmul.f32 %v569, %v129
    %v634 = vmul.f32 %v573, %v130
    %v635 = vmul.f32 %v573, %v131
    %v636 = vmul.f32 %v573, %v132
    %v637 = vmul.f32 %v573, %v133
    %v638 = vmul.f32 %v577, %v134
    %v639 = vmul.f32 %v577, %v135
    %v640 = vmul.f32 %v577, %v136
    %v641 = vmul.f32 %v577, %v137
    %v642 = vmul.f32 %v581, %v138
    %v643 = vmul.f32 %v581, %v139
    %v644 = vmul.f32 %v581, %v140
    %v645 = vmul.f32 %v581, %v141
    %v646 = vmul.f32 %v585, %v142
    %v647 = vmul.f32 %v585, %v143
    %v648 = vmul.f32 %v585, %v144
    %v649 = vmul.f32 %v585, %v145
    %v650 = vadd.f32 %v586, %v590
    %v651 = vadd.f32 %v650, %v594
    %v652 = vadd.f32 %v651, %v598
    %v653 = vadd.f32 %v652, %v602
    %v654 = vadd.f32 %v653, %v606
    %v655 = vadd.f32 %v654, %v610
    %v656 = vadd.f32 %v655, %v614
    %v657 = vadd.f32 %v656, %v618
    %v658 = vadd.f32 %v657, %v622
    %v659 = vadd.f32 %v658, %v626
    %v660 = vadd.f32 %v659, %v630
    %v661 = vadd.f32 %v660, %v634
    %v662 = vadd.f32 %v661, %v638
    %v663 = vadd.f32 %v662, %v642
    %v664 = vadd.f32 %v663, %v646
    %v665 = vadd.f32 %v587, %v591
    %v666 = vadd.f32 %v665, %v595
    %v667 = vadd.f32 %v666, %v599
    %v668 = vadd.f32 %v667, %v603
    %v669 = vadd.f32 %v668, %v607
    %v670 = vadd.f32 %v669, %v611
    %v671 = vadd.f32 %v670, %v615
    %v672 = vadd.f32 %v671, %v619
    %v673 = vadd.f32 %v672, %v623
    %v674 = vadd.f32 %v673, %v627
    %v675 = vadd.f32 %v674, %v631
    %v676 = vadd.f32 %v675, %v635
    %v677 = vadd.f32 %v676, %v639
    %v678 = vadd.f32 %v677, %v643
    %v679 = vadd.f32 %v678, %v647
    %v680 = vadd.f32 %v588, %v592
    %v681 = vadd.f32 %v680, %v596
    %v682 = vadd.f32 %v681, %v600
    %v683 = vadd.f32 %v682, %v604
    %v684 = vadd.f32 %v683, %v608
    %v685 = vadd.f32 %v684, %v612
    %v686 = vadd.f32 %v685, %v616
    %v687 = vadd.f32 %v686, %v620
    %v688 = vadd.f32 %v687, %v624
    %v689 = vadd.f32 %v688, %v628
    %v690 = vadd.f32 %v689, %v632
    %v691 = vadd.f32 %v690, %v636
    %v692 = vadd.f32 %v691, %v640
    %v693 = vadd.f32 %v692, %v644
    %v694 = vadd.f32 %v693, %v648
    %v695 = vadd.f32 %v589, %v593
    %v696 = vadd.f32 %v695, %v597
    %v697 = vadd.f32 %v696, %v601
    %v698 = vadd.f32 %v697, %v605
    %v699 = vadd.f32 %v698, %v609
    %v700 = vadd.f32 %v699, %v613
    %v701 = vadd.f32 %v700, %v617
    %v702 = vadd.f32 %v701, %v621
    %v703 = vadd.f32 %v702, %v625
    %v704 = vadd.f32 %v703, %v629
    %v705 = vadd.f32 %v704, %v633
    %v706 = vadd.f32 %v705, %v637
    %v707 = vadd.f32 %v706, %v641
    %v708 = vadd.f32 %v707, %v645
    %v709 = vadd.f32 %v708, %v649
    %v710 = vmul.f32 %v82, %v664
    %v711 = vmul.f32 %v83, %v679
    %v712 = vmul.f32 %v84, %v694
    %v713 = vmul.f32 %v85, %v709
    %v714 = vmul.f32 %v86, %v664
    %v715 = vmul.f32 %v87, %v679
    %v716 = vmul.f32 %v88, %v694
    %v717 = vmul.f32 %v89, %v709
    %v718 = vmul.f32 %v90, %v664
    %v719 = vmul.f32 %v91, %v679
    %v720 = vmul.f32 %v92, %v694
    %v721 = vmul.f32 %v93, %v709
    %v722 = vmul.f32 %v94, %v664
    %v723 = vmul.f32 %v95, %v679
    %v724 = vmul.f32 %v96, %v694
    %v725 = vmul.f32 %v97, %v709
    %v726 = vmul.f32 %v98, %v664
    %v727 = vmul.f32 %v99, %v679
    %v728 = vmul.f32 %v100, %v694
    %v729 = vmul.f32 %v101, %v709
    %v730 = vmul.f32 %v102, %v664
    %v731 = vmul.f32 %v103, %v679
    %v732 = vmul.f32 %v104, %v694
    %v733 = vmul.f32 %v105, %v709
    %v734 = vmul.f32 %v106, %v664
    %v735 = vmul.f32 %v107, %v679
    %v736 = vmul.f32 %v108, %v694
    %v737 = vmul.f32 %v109, %v709
    %v738 = vmul.f32 %v110, %v664
    %v739 = vmul.f32 %v111, %v679
    %v740 = vmul.f32 %v112, %v694
    %v741 = vmul.f32 %v113, %v709
    %v742 = vmul.f32 %v114, %v664
    %v743 = vmul.f32 %v115, %v679
    %v744 = vmul.f32 %v116, %v694
    %v745 = vmul.f32 %v117, %v709
    %v746 = vmul.f32 %v118, %v664
    %v747 = vmul.f32 %v119, %v679
    %v748 = vmul.f32 %v120, %v694
    %v749 = vmul.f32 %v121, %v709
    %v750 = vmul.f32 %v122, %v664
    %v751 = vmul.f32 %v123, %v679
    %v752 = vmul.f32 %v124, %v694
    %v753 = vmul.f32 %v125, %v709
    %v754 = vmul.f32 %v126, %v664
    %v755 = vmul.f32 %v127, %v679
    %v756 = vmul.f32 %v128, %v694
    %v757 = vmul.f32 %v129, %v709
    %v758 = vmul.f32 %v130, %v664
    %v759 = vmul.f32 %v131, %v679
    %v760 = vmul.f32 %v132, %v694
    %v761 = vmul.f32 %v133, %v709
    %v762 = vmul.f32 %v134, %v664
    %v763 = vmul.f32 %v135, %v679
    %v764 = vmul.f32 %v136, %v694
    %v765 = vmul.f32 %v137, %v709
    %v766 = vmul.f32 %v138, %v664
    %v767 = vmul.f32 %v139, %v679
    %v768 = vmul.f32 %v140, %v694
    %v769 = vmul.f32 %v141, %v709
    %v770 = vmul.f32 %v142, %v664
    %v771 = vmul.f32 %v143, %v679
    %v772 = vmul.f32 %v144, %v694
    %v773 = vmul.f32 %v145, %v709
    %v774 = vadd.f32 %v710, %v711
    %v775 = vadd.f32 %v774, %v712
    %v776 = vadd.f32 %v775, %v713
    %v777 = vrot.slane %v776, 4
    %v778 = vadd.f32 %v776, %v777
    %v779 = vrot.slane %v778, 2
    %v780 = vadd.f32 %v778, %v779
    %v781 = vrot.slane %v780, 1
    %v782 = vadd.f32 %v780, %v781
    %v783 = vadd.f32 %v714, %v715
    %v784 = vadd.f32 %v783, %v716
    %v785 = vadd.f32 %v784, %v717
    %v786 = vrot.slane %v785, 4
    %v787 = vadd.f32 %v785, %v786
    %v788 = vrot.slane %v787, 2
    %v789 = vadd.f32 %v787, %v788
    %v790 = vrot.slane %v789, 1
    %v791 = vadd.f32 %v789, %v790
    %v792 = vadd.f32 %v718, %v719
    %v793 = vadd.f32 %v792, %v720
    %v794 = vadd.f32 %v793, %v721
    %v795 = vrot.slane %v794, 4
    %v796 = vadd.f32 %v794, %v795
    %v797 = vrot.slane %v796, 2
    %v798 = vadd.f32 %v796, %v797
    %v799 = vrot.slane %v798, 1
    %v800 = vadd.f32 %v798, %v799
    %v801 = vadd.f32 %v722, %v723
    %v802 = vadd.f32 %v801, %v724
    %v803 = vadd.f32 %v802, %v725
    %v804 = vrot.slane %v803, 4
    %v805 = vadd.f32 %v803, %v804
    %v806 = vrot.slane %v805, 2
    %v807 = vadd.f32 %v805, %v806
    %v808 = vrot.slane %v807, 1
    %v809 = vadd.f32 %v807, %v808
    %v810 = vadd.f32 %v726, %v727
    %v811 = vadd.f32 %v810, %v728
    %v812 = vadd.f32 %v811, %v729
    %v813 = vrot.slane %v812, 4
    %v814 = vadd.f32 %v812, %v813
    %v815 = vrot.slane %v814, 2
    %v816 = vadd.f32 %v814, %v815
    %v817 = vrot.slane %v816, 1
    %v818 = vadd.f32 %v816, %v817
    %v819 = vadd.f32 %v730, %v731
    %v820 = vadd.f32 %v819, %v732
    %v821 = vadd.f32 %v820, %v733
    %v822 = vrot.slane %v821, 4
    %v823 = vadd.f32 %v821, %v822
    %v824 = vrot.slane %v823, 2
    %v825 = vadd.f32 %v823, %v824
    %v826 = vrot.slane %v825, 1
    %v827 = vadd.f32 %v825, %v826
    %v828 = vadd.f32 %v734, %v735
    %v829 = vadd.f32 %v828, %v736
    %v830 = vadd.f32 %v829, %v737
    %v831 = vrot.slane %v830, 4
    %v832 = vadd.f32 %v830, %v831
    %v833 = vrot.slane %v832, 2
    %v834 = vadd.f32 %v832, %v833
    %v835 = vrot.slane %v834, 1
    %v836 = vadd.f32 %v834, %v835
    %v837 = vadd.f32 %v738, %v739
    %v838 = vadd.f32 %v837, %v740
    %v839 = vadd.f32 %v838, %v741
    %v840 = vrot.slane %v839, 4
    %v841 = vadd.f32 %v839, %v840
    %v842 = vrot.slane %v841, 2
    %v843 = vadd.f32 %v841, %v842
    %v844 = vrot.slane %v843, 1
    %v845 = vadd.f32 %v843, %v844
    %v846 = vadd.f32 %v742, %v743
    %v847 = vadd.f32 %v846, %v744
    %v848 = vadd.f32 %v847, %v745
    %v849 = vrot.slane %v848, 4
    %v850 = vadd.f32 %v848, %v849
    %v851 = vrot.slane %v850, 2
    %v852 = vadd.f32 %v850, %v851
    %v853 = vrot.slane %v852, 1
    %v854 = vadd.f32 %v852, %v853
    %v855 = vadd.f32 %v746, %v747
    %v856 = vadd.f32 %v855, %v748
    %v857 = vadd.f32 %v856, %v749
    %v858 = vrot.slane %v857, 4
    %v859 = vadd.f32 %v857, %v858
    %v860 = vrot.slane %v859, 2
    %v861 = vadd.f32 %v859, %v860
    %v862 = vrot.slane %v861, 1
    %v863 = vadd.f32 %v861, %v862
    %v864 = vadd.f32 %v750, %v751
    %v865 = vadd.f32 %v864, %v752
    %v866 = vadd.f32 %v865, %v753
    %v867 = vrot.slane %v866, 4
    %v868 = vadd.f32 %v866, %v867
    %v869 = vrot.slane %v868, 2
    %v870 = vadd.f32 %v868, %v869
    %v871 = vrot.slane %v870, 1
    %v872 = vadd.f32 %v870, %v871
    %v873 = vadd.f32 %v754, %v755
    %v874 = vadd.f32 %v873, %v756
    %v875 = vadd.f32 %v874, %v757
    %v876 = vrot.slane %v875, 4
    %v877 = vadd.f32 %v875, %v876
    %v878 = vrot.slane %v877, 2
    %v879 = vadd.f32 %v877, %v878
    %v880 = vrot.slane %v879, 1
    %v881 = vadd.f32 %v879, %v880
    %v882 = vadd.f32 %v758, %v759
    %v883 = vadd.f32 %v882, %v760
    %v884 = vadd.f32 %v883, %v761
    %v885 = vrot.slane %v884, 4
    %v886 = vadd.f32 %v884, %v885
    %v887 = vrot.slane %v886, 2
    %v888 = vadd.f32 %v886, %v887
    %v889 = vrot.slane %v888, 1
    %v890 = vadd.f32 %v888, %v889
    %v891 = vadd.f32 %v762, %v763
    %v892 = vadd.f32 %v891, %v764
    %v893 = vadd.f32 %v892, %v765
    %v894 = vrot.slane %v893, 4
    %v895 = vadd.f32 %v893, %v894
    %v896 = vrot.slane %v895, 2
    %v897 = vadd.f32 %v895, %v896
    %v898 = vrot.slane %v897, 1
    %v899 = vadd.f32 %v897, %v898
    %v900 = vadd.f32 %v766, %v767
    %v901 = vadd.f32 %v900, %v768
    %v902 = vadd.f32 %v901, %v769
    %v903 = vrot.slane %v902, 4
    %v904 = vadd.f32 %v902, %v903
    %v905 = vrot.slane %v904, 2
    %v906 = vadd.f32 %v904, %v905
    %v907 = vrot.slane %v906, 1
    %v908 = vadd.f32 %v906, %v907
    %v909 = vadd.f32 %v770, %v771
    %v910 = vadd.f32 %v909, %v772
    %v911 = vadd.f32 %v910, %v773
    %v912 = vrot.slane %v911, 4
    %v913 = vadd.f32 %v911, %v912
    %v914 = vrot.slane %v913, 2
    %v915 = vadd.f32 %v913, %v914
    %v916 = vrot.slane %v915, 1
    %v917 = vadd.f32 %v915, %v916
    %v918 = vmax.f32 %v782, %v818
    %v919 = vmax.f32 %v791, %v827
    %v920 = vmax.f32 %v800, %v836
    %v921 = vmax.f32 %v809, %v845
    %v922 = vmax.f32 %v918, %v854
    %v923 = vmax.f32 %v919, %v863
    %v924 = vmax.f32 %v920, %v872
    %v925 = vmax.f32 %v921, %v881
    %v926 = vmax.f32 %v922, %v890
    %v927 = vmax.f32 %v923, %v899
    %v928 = vmax.f32 %v924, %v908
    %v929 = vmax.f32 %v925, %v917
    %v930 = vmax.f32 %v926, %v927
    %v931 = vmax.f32 %v928, %v929
    %v932 = vmax.f32 %v930, %v931
    %v933 = vsub.f32 %v782, %v932
    %v934 = vsub.f32 %v791, %v932
    %v935 = vsub.f32 %v800, %v932
    %v936 = vsub.f32 %v809, %v932
    %v937 = vsub.f32 %v818, %v932
    %v938 = vsub.f32 %v827, %v932
    %v939 = vsub.f32 %v836, %v932
    %v940 = vsub.f32 %v845, %v932
    %v941 = vsub.f32 %v854, %v932
    %v942 = vsub.f32 %v863, %v932
    %v943 = vsub.f32 %v872, %v932
    %v944 = vsub.f32 %v881, %v932
    %v945 = vsub.f32 %v890, %v932
    %v946 = vsub.f32 %v899, %v932
    %v947 = vsub.f32 %v908, %v932
    %v948 = vsub.f32 %v917, %v932
    %v949 = vmul.f32 %v933, 1.442695
    %v950 = vpow.pop %v949
    %v951 = vmul.f32 %v934, 1.442695
    %v952 = vpow.pop %v951
    %v953 = vmul.f32 %v935, 1.442695
    %v954 = vpow.pop %v953
    %v955 = vmul.f32 %v936, 1.442695
    %v956 = vpow.pop %v955
    %v957 = vmul.f32 %v937, 1.442695
    %v958 = vpow.pop %v957
    %v959 = vmul.f32 %v938, 1.442695
    %v960 = vpow.pop %v959
    %v961 = vmul.f32 %v939, 1.442695
    %v962 = vpow.pop %v961
    %v963 = vmul.f32 %v940, 1.442695
    %v964 = vpow.pop %v963
    %v965 = vmul.f32 %v941, 1.442695
    %v966 = vpow.pop %v965
    %v967 = vmul.f32 %v942, 1.442695
    %v968 = vpow.pop %v967
    %v969 = vmul.f32 %v943, 1.442695
    %v970 = vpow.pop %v969
    %v971 = vmul.f32 %v944, 1.442695
    %v972 = vpow.pop %v971
    %v973 = vmul.f32 %v945, 1.442695
    %v974 = vpow.pop %v973
    %v975 = vmul.f32 %v946, 1.442695
    %v976 = vpow.pop %v975
    %v977 = vmul.f32 %v947, 1.442695
    %v978 = vpow.pop %v977
    %v979 = vmul.f32 %v948, 1.442695
    %v980 = vpow.pop %v979
    %v997 = vrot.slane %v952, 7
    %v998 = vsel %vm458, %v997, %v950
    %v999 = vrot.slane %v954, 6
    %v1000 = vsel %vm461, %v999, %v998
    %v1001 = vrot.slane %v956, 5
    %v1002 = vsel %vm464, %v1001, %v1000
    %v1003 = vrot.slane %v958, 4
    %v1004 = vsel %vm467, %v1003, %v1002
    %v1005 = vrot.slane %v960, 3
    %v1006 = vsel %vm470, %v1005, %v1004
    %v1007 = vrot.slane %v962, 2
    %v1008 = vsel %vm473, %v1007, %v1006
    %v1009 = vrot.slane %v964, 1
    %v1010 = vsel %vm476, %v1009, %v1008
    %v1011 = vrot.slane %v968, 7
    %v1012 = vsel %vm458, %v1011, %v966
    %v1013 = vrot.slane %v970, 6
    %v1014 = vsel %vm461, %v1013, %v1012
    %v1015 = vrot.slane %v972, 5
    %v1016 = vsel %vm464, %v1015, %v1014
    %v1017 = vrot.slane %v974, 4
    %v1018 = vsel %vm467, %v1017, %v1016
    %v1019 = vrot.slane %v976, 3
    %v1020 = vsel %vm470, %v1019, %v1018
    %v1021 = vrot.slane %v978, 2
    %v1022 = vsel %vm473, %v1021, %v1020
    %v1023 = vrot.slane %v980, 1
    %v1024 = vsel %vm476, %v1023, %v1022
    %v1027 = vadd.f32 %v1010, %v1024
    %v1028 = vrot.slane %v1027, 4
    %v1029 = vadd.f32 %v1027, %v1028
    %v1030 = vrot.slane %v1029, 2
    %v1031 = vadd.f32 %v1029, %v1030
    %v1032 = vrot.slane %v1031, 1
    %v1033 = vadd.f32 %v1031, %v1032
    %v1034 = vrcp.pop %v1033
    %v1035 = vlaneseq
    %v1036 = vshrl.u32 %v1035, 7
    %v1037 = vsub.s32 0, %v1036
    %v1038 = vrot.slane %v1034, %v1037
    %v1039 = vmul.f32 %v950, %v1038
    %v1040 = vmul.f32 %v952, %v1038
    %v1041 = vmul.f32 %v954, %v1038
    %v1042 = vmul.f32 %v956, %v1038
    %v1043 = vmul.f32 %v958, %v1038
    %v1044 = vmul.f32 %v960, %v1038
    %v1045 = vmul.f32 %v962, %v1038
    %v1046 = vmul.f32 %v964, %v1038
    %v1047 = vmul.f32 %v966, %v1038
    %v1048 = vmul.f32 %v968, %v1038
    %v1049 = vmul.f32 %v970, %v1038
    %v1050 = vmul.f32 %v972, %v1038
    %v1051 = vmul.f32 %v974, %v1038
    %v1052 = vmul.f32 %v976, %v1038
    %v1053 = vmul.f32 %v978, %v1038
    %v1054 = vmul.f32 %v980, %v1038
    %v1055 = vld [vmem:[%s2] sm:$0xff]
    %v1056 = vld [vmem:[%s2 + $0x8] sm:$0xff]
    %v1057 = vld [vmem:[%s2 + $0x10] sm:$0xff]
    %v1058 = vld [vmem:[%s2 + $0x18] sm:$0xff]
    %v1059 = vld [vmem:[%s2 + $0x20] sm:$0xff]
    %v1060 = vld [vmem:[%s2 + $0x28] sm:$0xff]
    %v1061 = vld [vmem:[%s2 + $0x30] sm:$0xff]
    %v1062 = vld [vmem:[%s2 + $0x38] sm:$0xff]
    %v1063 = vld [vmem:[%s2 + $0x40] sm:$0xff]
    %v1064 = vld [vmem:[%s2 + $0x48] sm:$0xff]
    %v1065 = vld [vmem:[%s2 + $0x50] sm:$0xff]
    %v1066 = vld [vmem:[%s2 + $0x58] sm:$0xff]
    %v1067 = vld [vmem:[%s2 + $0x60] sm:$0xff]
    %v1068 = vld [vmem:[%s2 + $0x68] sm:$0xff]
    %v1069 = vld [vmem:[%s2 + $0x70] sm:$0xff]
    %v1086 = vrot.slane %v507, 7
    %v1087 = vsel %vm458, %v1086, %v506
    %v1088 = vrot.slane %v508, 6
    %v1089 = vsel %vm461, %v1088, %v1087
    %v1090 = vrot.slane %v509, 5
    %v1091 = vsel %vm464, %v1090, %v1089
    %v1092 = vrot.slane %v510, 4
    %v1093 = vsel %vm467, %v1092, %v1091
    %v1094 = vrot.slane %v511, 3
    %v1095 = vsel %vm470, %v1094, %v1093
    %v1096 = vrot.slane %v512, 2
    %v1097 = vsel %vm473, %v1096, %v1095
    %v1098 = vrot.slane %v513, 1
    %v1099 = vsel %vm476, %v1098, %v1097
    %v1100 = vrot.slane %v515, 7
    %v1101 = vsel %vm458, %v1100, %v514
    %v1102 = vrot.slane %v516, 6
    %v1103 = vsel %vm461, %v1102, %v1101
    %v1104 = vrot.slane %v517, 5
    %v1105 = vsel %vm464, %v1104, %v1103
    %v1106 = vrot.slane %v518, 4
    %v1107 = vsel %vm467, %v1106, %v1105
    %v1108 = vrot.slane %v519, 3
    %v1109 = vsel %vm470, %v1108, %v1107
    %v1110 = vrot.slane %v520, 2
    %v1111 = vsel %vm473, %v1110, %v1109
    %v1112 = vrot.slane %v521, 1
    %v1113 = vsel %vm476, %v1112, %v1111
    %vm1116 = vcmask 130048
    %v1118 = vsel %vm1116, %v1055, 0
    %v1121 = vsel %vm1116, %v1056, 0
    %v1124 = vsel %vm1116, %v1057, 0
    %v1127 = vsel %vm1116, %v1058, 0
    %v1130 = vsel %vm1116, %v1059, 0
    %v1133 = vsel %vm1116, %v1060, 0
    %v1136 = vsel %vm1116, %v1061, 0
    %v1139 = vsel %vm1116, %v1062, 0
    %v1142 = vsel %vm1116, %v1063, 0
    %v1145 = vsel %vm1116, %v1064, 0
    %v1148 = vsel %vm1116, %v1065, 0
    %v1151 = vsel %vm1116, %v1066, 0
    %v1154 = vsel %vm1116, %v1067, 0
    %v1157 = vsel %vm1116, %v1068, 0
    %v1160 = vsel %vm1116, %v1069, 0
    %1162 = vmatprep.subr.mxu0 0.0
    %1163 = vmatpush1.msra.mxu0 %v1099
    %1164 = vmatprep.subr.mxu0 0.0
    %1165 = vmatpush1.msra.mxu0 %v1113
    %1166 = vmatprep.subr.mxu0 0.0
    %1167 = vmatpush1.msra.mxu0 0.0
    %1168 = vmatprep.subr.mxu0 0.0
    %1169 = vmatpush1.msra.mxu0 0.0
    %1170 = vmatprep.subr.mxu0 0.0
    %1171 = vmatpush1.msra.mxu0 0.0
    %1172 = vmatprep.subr.mxu0 0.0
    %1173 = vmatpush1.msra.mxu0 0.0
    %1174 = vmatprep.subr.mxu0 0.0
    %1175 = vmatpush1.msra.mxu0 0.0
    %1176 = vmatprep.subr.mxu0 0.0
    %1177 = vmatpush1.msra.mxu0 0.0
    %1178 = vmatprep.subr.mxu0 0.0
    %1179 = vmatpush1.msra.mxu0 0.0
    %1180 = vmatprep.subr.mxu0 0.0
    %1181 = vmatpush1.msra.mxu0 0.0
    %1182 = vmatprep.subr.mxu0 0.0
    %1183 = vmatpush1.msra.mxu0 0.0
    %1184 = vmatprep.subr.mxu0 0.0
    %1185 = vmatpush1.msra.mxu0 0.0
    %1186 = vmatprep.subr.mxu0 0.0
    %1187 = vmatpush1.msra.mxu0 0.0
    %1188 = vmatprep.subr.mxu0 0.0
    %1189 = vmatpush1.msra.mxu0 0.0
    %1190 = vmatprep.subr.mxu0 0.0
    %1191 = vmatpush1.msra.mxu0 0.0
    %1192 = vmatprep.subr.mxu0 0.0
    %1193 = vmatpush1.msra.mxu0 0.0
    %1194 = vmatprep.subr.mxu0 0.0
    %1195 = vmatpush1.msra.mxu0 0.0
    %1196 = vmatprep.subr.mxu0 0.0
    %1197 = vmatpush1.msra.mxu0 0.0
    %1198 = vmatprep.subr.mxu0 0.0
    %1199 = vmatpush1.msra.mxu0 0.0
    %1200 = vmatprep.subr.mxu0 0.0
    %1201 = vmatpush1.msra.mxu0 0.0
    %1202 = vmatprep.subr.mxu0 0.0
    %1203 = vmatpush1.msra.mxu0 0.0
    %1204 = vmatprep.subr.mxu0 0.0
    %1205 = vmatpush1.msra.mxu0 0.0
    %1206 = vmatprep.subr.mxu0 0.0
    %1207 = vmatpush1.msra.mxu0 0.0
    %1208 = vmatprep.subr.mxu0 0.0
    %1209 = vmatpush1.msra.mxu0 0.0
    %1210 = vmatprep.subr.mxu0 0.0
    %1211 = vmatpush1.msra.mxu0 0.0
    %1212 = vmatprep.subr.mxu0 0.0
    %1213 = vmatpush1.msra.mxu0 0.0
    %1214 = vmatprep.subr.mxu0 0.0
    %1215 = vmatpush1.msra.mxu0 0.0
    %1216 = vmatprep.subr.mxu0 0.0
    %1217 = vmatpush1.msra.mxu0 0.0
    %1218 = vmatprep.subr.mxu0 0.0
    %1219 = vmatpush1.msra.mxu0 0.0
    %1220 = vmatprep.subr.mxu0 0.0
    %1221 = vmatpush1.msra.mxu0 0.0
    %1222 = vmatprep.subr.mxu0 0.0
    %1223 = vmatpush1.msra.mxu0 0.0
    %1224 = vmatprep.subr.mxu0 0.0
    %1225 = vmatpush1.msra.mxu0 0.0
    %1226 = vmatprep.mubr.f32.mxu0 0.0
    %1227 = vmatmul.mubr.f32.gmra.mrb[0].mxu0 %v1118
    %v1228 = vpop.f32.mrb[0].mxu0
    %v1229 = vadd.f32 0.0, %v1228
    %v1230 = vpop.f32.mrb[0].mxu0
    %1231 = vmatprep.mubr.f32.mxu0 0.0
    %1232 = vmatmul.mubr.f32.gmra.mrb[0].mxu0 %v1121
    %v1233 = vpop.f32.mrb[0].mxu0
    %v1234 = vadd.f32 0.0, %v1233
    %v1235 = vpop.f32.mrb[0].mxu0
    %1236 = vmatprep.mubr.f32.mxu0 0.0
    %1237 = vmatmul.mubr.f32.gmra.mrb[0].mxu0 %v1124
    %v1238 = vpop.f32.mrb[0].mxu0
    %v1239 = vadd.f32 0.0, %v1238
    %v1240 = vpop.f32.mrb[0].mxu0
    %1241 = vmatprep.mubr.f32.mxu0 0.0
    %1242 = vmatmul.mubr.f32.gmra.mrb[0].mxu0 %v1127
    %v1243 = vpop.f32.mrb[0].mxu0
    %v1244 = vadd.f32 0.0, %v1243
    %v1245 = vpop.f32.mrb[0].mxu0
    %1246 = vmatprep.mubr.f32.mxu0 0.0
    %1247 = vmatmul.mubr.f32.gmra.mrb[0].mxu0 %v1130
    %v1248 = vpop.f32.mrb[0].mxu0
    %v1249 = vadd.f32 0.0, %v1248
    %v1250 = vpop.f32.mrb[0].mxu0
    %1251 = vmatprep.mubr.f32.mxu0 0.0
    %1252 = vmatmul.mubr.f32.gmra.mrb[0].mxu0 %v1133
    %v1253 = vpop.f32.mrb[0].mxu0
    %v1254 = vadd.f32 0.0, %v1253
    %v1255 = vpop.f32.mrb[0].mxu0
    %1256 = vmatprep.mubr.f32.mxu0 0.0
    %1257 = vmatmul.mubr.f32.gmra.mrb[0].mxu0 %v1136
    %v1258 = vpop.f32.mrb[0].mxu0
    %v1259 = vadd.f32 0.0, %v1258
    %v1260 = vpop.f32.mrb[0].mxu0
    %1261 = vmatprep.mubr.f32.mxu0 0.0
    %1262 = vmatmul.mubr.f32.gmra.mrb[0].mxu0 %v1139
    %v1263 = vpop.f32.mrb[0].mxu0
    %v1264 = vadd.f32 0.0, %v1263
    %v1265 = vpop.f32.mrb[0].mxu0
    %1266 = vmatprep.mubr.f32.mxu0 0.0
    %1267 = vmatmul.mubr.f32.gmra.mrb[0].mxu0 %v1142
    %v1268 = vpop.f32.mrb[0].mxu0
    %v1269 = vadd.f32 0.0, %v1268
    %v1270 = vpop.f32.mrb[0].mxu0
    %1271 = vmatprep.mubr.f32.mxu0 0.0
    %1272 = vmatmul.mubr.f32.gmra.mrb[0].mxu0 %v1145
    %v1273 = vpop.f32.mrb[0].mxu0
    %v1274 = vadd.f32 0.0, %v1273
    %v1275 = vpop.f32.mrb[0].mxu0
    %1276 = vmatprep.mubr.f32.mxu0 0.0
    %1277 = vmatmul.mubr.f32.gmra.mrb[0].mxu0 %v1148
    %v1278 = vpop.f32.mrb[0].mxu0
    %v1279 = vadd.f32 0.0, %v1278
    %v1280 = vpop.f32.mrb[0].mxu0
    %1281 = vmatprep.mubr.f32.mxu0 0.0
    %1282 = vmatmul.mubr.f32.gmra.mrb[0].mxu0 %v1151
    %v1283 = vpop.f32.mrb[0].mxu0
    %v1284 = vadd.f32 0.0, %v1283
    %v1285 = vpop.f32.mrb[0].mxu0
    %1286 = vmatprep.mubr.f32.mxu0 0.0
    %1287 = vmatmul.mubr.f32.gmra.mrb[0].mxu0 %v1154
    %v1288 = vpop.f32.mrb[0].mxu0
    %v1289 = vadd.f32 0.0, %v1288
    %v1290 = vpop.f32.mrb[0].mxu0
    %1291 = vmatprep.mubr.f32.mxu0 0.0
    %1292 = vmatmul.mubr.f32.gmra.mrb[0].mxu0 %v1157
    %v1293 = vpop.f32.mrb[0].mxu0
    %v1294 = vadd.f32 0.0, %v1293
    %v1295 = vpop.f32.mrb[0].mxu0
    %1296 = vmatprep.mubr.f32.mxu0 0.0
    %1297 = vmatmul.mubr.f32.gmra.mrb[0].mxu0 %v1160
    %v1298 = vpop.f32.mrb[0].mxu0
    %v1299 = vadd.f32 0.0, %v1298
    %v1300 = vpop.f32.mrb[0].mxu0
    %1301 = vdwg.mxu0
    %v1302 = vld [vmem:[%s3] sm:$0xff]
    %v1303 = vld [vmem:[%s3 + $0x8] sm:$0xff]
    %v1304 = vld [vmem:[%s3 + $0x10] sm:$0xff]
    %v1305 = vld [vmem:[%s3 + $0x18] sm:$0xff]
    %v1306 = vld [vmem:[%s3 + $0x20] sm:$0xff]
    %v1307 = vld [vmem:[%s3 + $0x28] sm:$0xff]
    %v1308 = vld [vmem:[%s3 + $0x30] sm:$0xff]
    %v1309 = vld [vmem:[%s3 + $0x38] sm:$0xff]
    %v1310 = vld [vmem:[%s3 + $0x40] sm:$0xff]
    %v1311 = vld [vmem:[%s3 + $0x48] sm:$0xff]
    %v1312 = vld [vmem:[%s3 + $0x50] sm:$0xff]
    %v1313 = vld [vmem:[%s3 + $0x58] sm:$0xff]
    %v1314 = vld [vmem:[%s3 + $0x60] sm:$0xff]
    %v1315 = vld [vmem:[%s3 + $0x68] sm:$0xff]
    %v1316 = vld [vmem:[%s3 + $0x70] sm:$0xff]
    %v1333 = vrot.slane %v1040, 7
    %v1334 = vsel %vm458, %v1333, %v1039
    %v1335 = vrot.slane %v1041, 6
    %v1336 = vsel %vm461, %v1335, %v1334
    %v1337 = vrot.slane %v1042, 5
    %v1338 = vsel %vm464, %v1337, %v1336
    %v1339 = vrot.slane %v1043, 4
    %v1340 = vsel %vm467, %v1339, %v1338
    %v1341 = vrot.slane %v1044, 3
    %v1342 = vsel %vm470, %v1341, %v1340
    %v1343 = vrot.slane %v1045, 2
    %v1344 = vsel %vm473, %v1343, %v1342
    %v1345 = vrot.slane %v1046, 1
    %v1346 = vsel %vm476, %v1345, %v1344
    %v1347 = vrot.slane %v1048, 7
    %v1348 = vsel %vm458, %v1347, %v1047
    %v1349 = vrot.slane %v1049, 6
    %v1350 = vsel %vm461, %v1349, %v1348
    %v1351 = vrot.slane %v1050, 5
    %v1352 = vsel %vm464, %v1351, %v1350
    %v1353 = vrot.slane %v1051, 4
    %v1354 = vsel %vm467, %v1353, %v1352
    %v1355 = vrot.slane %v1052, 3
    %v1356 = vsel %vm470, %v1355, %v1354
    %v1357 = vrot.slane %v1053, 2
    %v1358 = vsel %vm473, %v1357, %v1356
    %v1359 = vrot.slane %v1054, 1
    %v1360 = vsel %vm476, %v1359, %v1358
    %v1364 = vsel %vm1116, %v1302, 0
    %v1367 = vsel %vm1116, %v1303, 0
    %v1370 = vsel %vm1116, %v1304, 0
    %v1373 = vsel %vm1116, %v1305, 0
    %v1376 = vsel %vm1116, %v1306, 0
    %v1379 = vsel %vm1116, %v1307, 0
    %v1382 = vsel %vm1116, %v1308, 0
    %v1385 = vsel %vm1116, %v1309, 0
    %v1388 = vsel %vm1116, %v1310, 0
    %v1391 = vsel %vm1116, %v1311, 0
    %v1394 = vsel %vm1116, %v1312, 0
    %v1397 = vsel %vm1116, %v1313, 0
    %v1400 = vsel %vm1116, %v1314, 0
    %v1403 = vsel %vm1116, %v1315, 0
    %v1406 = vsel %vm1116, %v1316, 0
    %1408 = vmatprep.subr.mxu0 0.0
    %1409 = vmatpush1.msra.mxu0 %v1346
    %1410 = vmatprep.subr.mxu0 0.0
    %1411 = vmatpush1.msra.mxu0 %v1360
    %1412 = vmatprep.subr.mxu0 0.0
    %1413 = vmatpush1.msra.mxu0 0.0
    %1414 = vmatprep.subr.mxu0 0.0
    %1415 = vmatpush1.msra.mxu0 0.0
    %1416 = vmatprep.subr.mxu0 0.0
    %1417 = vmatpush1.msra.mxu0 0.0
    %1418 = vmatprep.subr.mxu0 0.0
    %1419 = vmatpush1.msra.mxu0 0.0
    %1420 = vmatprep.subr.mxu0 0.0
    %1421 = vmatpush1.msra.mxu0 0.0
    %1422 = vmatprep.subr.mxu0 0.0
    %1423 = vmatpush1.msra.mxu0 0.0
    %1424 = vmatprep.subr.mxu0 0.0
    %1425 = vmatpush1.msra.mxu0 0.0
    %1426 = vmatprep.subr.mxu0 0.0
    %1427 = vmatpush1.msra.mxu0 0.0
    %1428 = vmatprep.subr.mxu0 0.0
    %1429 = vmatpush1.msra.mxu0 0.0
    %1430 = vmatprep.subr.mxu0 0.0
    %1431 = vmatpush1.msra.mxu0 0.0
    %1432 = vmatprep.subr.mxu0 0.0
    %1433 = vmatpush1.msra.mxu0 0.0
    %1434 = vmatprep.subr.mxu0 0.0
    %1435 = vmatpush1.msra.mxu0 0.0
    %1436 = vmatprep.subr.mxu0 0.0
    %1437 = vmatpush1.msra.mxu0 0.0
    %1438 = vmatprep.subr.mxu0 0.0
    %1439 = vmatpush1.msra.mxu0 0.0
    %1440 = vmatprep.subr.mxu0 0.0
    %1441 = vmatpush1.msra.mxu0 0.0
    %1442 = vmatprep.subr.mxu0 0.0
    %1443 = vmatpush1.msra.mxu0 0.0
    %1444 = vmatprep.subr.mxu0 0.0
    %1445 = vmatpush1.msra.mxu0 0.0
    %1446 = vmatprep.subr.mxu0 0.0
    %1447 = vmatpush1.msra.mxu0 0.0
    %1448 = vmatprep.subr.mxu0 0.0
    %1449 = vmatpush1.msra.mxu0 0.0
    %1450 = vmatprep.subr.mxu0 0.0
    %1451 = vmatpush1.msra.mxu0 0.0
    %1452 = vmatprep.subr.mxu0 0.0
    %1453 = vmatpush1.msra.mxu0 0.0
    %1454 = vmatprep.subr.mxu0 0.0
    %1455 = vmatpush1.msra.mxu0 0.0
    %1456 = vmatprep.subr.mxu0 0.0
    %1457 = vmatpush1.msra.mxu0 0.0
    %1458 = vmatprep.subr.mxu0 0.0
    %1459 = vmatpush1.msra.mxu0 0.0
    %1460 = vmatprep.subr.mxu0 0.0
    %1461 = vmatpush1.msra.mxu0 0.0
    %1462 = vmatprep.subr.mxu0 0.0
    %1463 = vmatpush1.msra.mxu0 0.0
    %1464 = vmatprep.subr.mxu0 0.0
    %1465 = vmatpush1.msra.mxu0 0.0
    %1466 = vmatprep.subr.mxu0 0.0
    %1467 = vmatpush1.msra.mxu0 0.0
    %1468 = vmatprep.subr.mxu0 0.0
    %1469 = vmatpush1.msra.mxu0 0.0
    %1470 = vmatprep.subr.mxu0 0.0
    %1471 = vmatpush1.msra.mxu0 0.0
    %1472 = vmatprep.mubr.f32.mxu0 0.0
    %1473 = vmatmul.mubr.f32.gmra.mrb[0].mxu0 %v1364
    %v1474 = vpop.f32.mrb[0].mxu0
    %v1475 = vadd.f32 0.0, %v1474
    %v1476 = vpop.f32.mrb[0].mxu0
    %1477 = vmatprep.mubr.f32.mxu0 0.0
    %1478 = vmatmul.mubr.f32.gmra.mrb[0].mxu0 %v1367
    %v1479 = vpop.f32.mrb[0].mxu0
    %v1480 = vadd.f32 0.0, %v1479
    %v1481 = vpop.f32.mrb[0].mxu0
    %1482 = vmatprep.mubr.f32.mxu0 0.0
    %1483 = vmatmul.mubr.f32.gmra.mrb[0].mxu0 %v1370
    %v1484 = vpop.f32.mrb[0].mxu0
    %v1485 = vadd.f32 0.0, %v1484
    %v1486 = vpop.f32.mrb[0].mxu0
    %1487 = vmatprep.mubr.f32.mxu0 0.0
    %1488 = vmatmul.mubr.f32.gmra.mrb[0].mxu0 %v1373
    %v1489 = vpop.f32.mrb[0].mxu0
    %v1490 = vadd.f32 0.0, %v1489
    %v1491 = vpop.f32.mrb[0].mxu0
    %1492 = vmatprep.mubr.f32.mxu0 0.0
    %1493 = vmatmul.mubr.f32.gmra.mrb[0].mxu0 %v1376
    %v1494 = vpop.f32.mrb[0].mxu0
    %v1495 = vadd.f32 0.0, %v1494
    %v1496 = vpop.f32.mrb[0].mxu0
    %1497 = vmatprep.mubr.f32.mxu0 0.0
    %1498 = vmatmul.mubr.f32.gmra.mrb[0].mxu0 %v1379
    %v1499 = vpop.f32.mrb[0].mxu0
    %v1500 = vadd.f32 0.0, %v1499
    %v1501 = vpop.f32.mrb[0].mxu0
    %1502 = vmatprep.mubr.f32.mxu0 0.0
    %1503 = vmatmul.mubr.f32.gmra.mrb[0].mxu0 %v1382
    %v1504 = vpop.f32.mrb[0].mxu0
    %v1505 = vadd.f32 0.0, %v1504
    %v1506 = vpop.f32.mrb[0].mxu0
    %1507 = vmatprep.mubr.f32.mxu0 0.0
    %1508 = vmatmul.mubr.f32.gmra.mrb[0].mxu0 %v1385
    %v1509 = vpop.f32.mrb[0].mxu0
    %v1510 = vadd.f32 0.0, %v1509
    %v1511 = vpop.f32.mrb[0].mxu0
    %1512 = vmatprep.mubr.f32.mxu0 0.0
    %1513 = vmatmul.mubr.f32.gmra.mrb[0].mxu0 %v1388
    %v1514 = vpop.f32.mrb[0].mxu0
    %v1515 = vadd.f32 0.0, %v1514
    %v1516 = vpop.f32.mrb[0].mxu0
    %1517 = vmatprep.mubr.f32.mxu0 0.0
    %1518 = vmatmul.mubr.f32.gmra.mrb[0].mxu0 %v1391
    %v1519 = vpop.f32.mrb[0].mxu0
    %v1520 = vadd.f32 0.0, %v1519
    %v1521 = vpop.f32.mrb[0].mxu0
    %1522 = vmatprep.mubr.f32.mxu0 0.0
    %1523 = vmatmul.mubr.f32.gmra.mrb[0].mxu0 %v1394
    %v1524 = vpop.f32.mrb[0].mxu0
    %v1525 = vadd.f32 0.0, %v1524
    %v1526 = vpop.f32.mrb[0].mxu0
    %1527 = vmatprep.mubr.f32.mxu0 0.0
    %1528 = vmatmul.mubr.f32.gmra.mrb[0].mxu0 %v1397
    %v1529 = vpop.f32.mrb[0].mxu0
    %v1530 = vadd.f32 0.0, %v1529
    %v1531 = vpop.f32.mrb[0].mxu0
    %1532 = vmatprep.mubr.f32.mxu0 0.0
    %1533 = vmatmul.mubr.f32.gmra.mrb[0].mxu0 %v1400
    %v1534 = vpop.f32.mrb[0].mxu0
    %v1535 = vadd.f32 0.0, %v1534
    %v1536 = vpop.f32.mrb[0].mxu0
    %1537 = vmatprep.mubr.f32.mxu0 0.0
    %1538 = vmatmul.mubr.f32.gmra.mrb[0].mxu0 %v1403
    %v1539 = vpop.f32.mrb[0].mxu0
    %v1540 = vadd.f32 0.0, %v1539
    %v1541 = vpop.f32.mrb[0].mxu0
    %1542 = vmatprep.mubr.f32.mxu0 0.0
    %1543 = vmatmul.mubr.f32.gmra.mrb[0].mxu0 %v1406
    %v1544 = vpop.f32.mrb[0].mxu0
    %v1545 = vadd.f32 0.0, %v1544
    %v1546 = vpop.f32.mrb[0].mxu0
    %1547 = vdwg.mxu0
    %v1548 = vmul.f32 %v1229, %v1475
    %v1549 = vmul.f32 %v1234, %v1480
    %v1550 = vmul.f32 %v1239, %v1485
    %v1551 = vmul.f32 %v1244, %v1490
    %v1552 = vmul.f32 %v1249, %v1495
    %v1553 = vmul.f32 %v1254, %v1500
    %v1554 = vmul.f32 %v1259, %v1505
    %v1555 = vmul.f32 %v1264, %v1510
    %v1556 = vmul.f32 %v1269, %v1515
    %v1557 = vmul.f32 %v1274, %v1520
    %v1558 = vmul.f32 %v1279, %v1525
    %v1559 = vmul.f32 %v1284, %v1530
    %v1560 = vmul.f32 %v1289, %v1535
    %v1561 = vmul.f32 %v1294, %v1540
    %v1562 = vmul.f32 %v1299, %v1545
    %1563 = vst [vmem:[#allocation2] sm:$0xff] %v1548
    %1564 = vst [vmem:[#allocation2 + $0x8] sm:$0xff] %v1549
    %1565 = vst [vmem:[#allocation2 + $0x10] sm:$0xff] %v1550
    %1566 = vst [vmem:[#allocation2 + $0x18] sm:$0xff] %v1551
    %1567 = vst [vmem:[#allocation2 + $0x20] sm:$0xff] %v1552
    %1568 = vst [vmem:[#allocation2 + $0x28] sm:$0xff] %v1553
    %1569 = vst [vmem:[#allocation2 + $0x30] sm:$0xff] %v1554
    %1570 = vst [vmem:[#allocation2 + $0x38] sm:$0xff] %v1555
    %1571 = vst [vmem:[#allocation2 + $0x40] sm:$0xff] %v1556
    %1572 = vst [vmem:[#allocation2 + $0x48] sm:$0xff] %v1557
    %1573 = vst [vmem:[#allocation2 + $0x50] sm:$0xff] %v1558
    %1574 = vst [vmem:[#allocation2 + $0x58] sm:$0xff] %v1559
    %1575 = vst [vmem:[#allocation2 + $0x60] sm:$0xff] %v1560
    %1576 = vst [vmem:[#allocation2 + $0x68] sm:$0xff] %v1561
    %1577 = vst [vmem:[#allocation2 + $0x70] sm:$0xff] %v1562
    // Predicated region
    $region18: #{tpu_custom_call.1} parent=1 // pred_check
      _
    $region19: #{tpu_custom_call.1} parent=1 // pred_check_branch
      %1579 = sbr.rel (0) target = $region21
    $region20: #{tpu_custom_call.1} parent=1 // pred_region
      %s1581 = ssub.s32 1920, 1920
      %1582 = vsyncadd [#allocation3], %s1581
      %s1583 = sshll.u32 [#allocation2], 4
      %s1584 = int_to_ptr.vmem [resolvable:$true] %s1583
      %1589 = dma.vmem_to_hbm [thread:$0]  %s1584, 1920, %s4, [#allocation3], 128, 128, 8
    $region21: #{tpu_custom_call.1} parent=1 // pred_fallthru
      _
    // Predicated region
    $region22: #{tpu_custom_call.1} parent=1 // pred_check
      _
    $region23: #{tpu_custom_call.1} parent=1 // pred_check_branch
      %1591 = sbr.rel (0) target = $region25
    $region24: #{tpu_custom_call.1} parent=1 // pred_region
      %1592 = dma.done [#allocation3], 1920
    $region25: #{tpu_custom_call.1} parent=1 // pred_fallthru
      _
    %1593 = vsyncpa [#allocation3], 1

</llo_original>
